<compile_context>
chip_gen: v7x
topology: tpu7x:2x2x1
jax: 0.10.0
libtpu: 0.0.40
codegen_flags: <defaults>
</compile_context>

<pallas_src>
from functools import partial

import jax
import jax.numpy as jnp
from jax.experimental import pallas as pl
from jax.experimental.pallas import tpu as pltpu


def _decoder_kernel(z_ref, w1_ref, b1_ref, w2_ref, b2_ref, out_ref):
    # Hidden layer: z @ W1 + b1, ReLU (f32 accumulation on the MXU).
    h = jnp.dot(z_ref[...], w1_ref[...], preferred_element_type=jnp.float32)
    h = jnp.maximum(h + b1_ref[...], 0.0)            # (TB, H) + (1, H)
    # Output layer: h @ W2 + b2, Sigmoid.
    o = jnp.dot(h, w2_ref[...], preferred_element_type=jnp.float32)
    o = o + b2_ref[...]                               # (TB, O) + (1, O)
    # sigmoid(x) == 0.5 * tanh(0.5 * x) + 0.5  -> transcendental on the EUP.
    out_ref[...] = (0.5 * jnp.tanh(0.5 * o) + 0.5).astype(out_ref.dtype)


def _round_up(x, m):
    return ((x + m - 1) // m) * m


def _compute_tb(batch, block_b):
    """Batch tile: multiple of 8, and >= 2 grid steps when possible (v7x)."""
    b8 = _round_up(batch, 8)
    tb = min(_round_up(max(block_b, 8), 8), b8)
    if tb >= b8 and b8 >= 16:
        # Single grid step would leave one v7x TensorCore idle; split in two.
        tb = max(_round_up(b8 // 2, 8), 8)
    return tb


def prepare_decoder_params(w1, b1, w2, b2):
    """One-time parameter prep (call at init, NOT per forward).

    Pads the hidden dimension up to a multiple of 128 so the in-kernel hidden
    intermediate is lane-dense.  Exact: padded hidden units have zero weight
    and zero bias, ReLU keeps them zero, and their outgoing W2 rows are zero.
    z_dim and out_ch are left untouched (no per-call pad / post-kernel slice).
    """
    z_dim, n_hidden = w1.shape
    out_ch = w2.shape[1]
    b1 = b1.reshape(1, n_hidden)
    b2 = b2.reshape(1, out_ch)
    nh_p = _round_up(n_hidden, 128)
    if nh_p != n_hidden:
        w1 = jnp.pad(w1, ((0, 0), (0, nh_p - n_hidden)))
        b1 = jnp.pad(b1, ((0, 0), (0, nh_p - n_hidden)))
        w2 = jnp.pad(w2, ((0, nh_p - n_hidden), (0, 0)))
    return w1, b1, w2, b2


@partial(jax.jit, static_argnames=("block_b",))
def decoder_forward(z, w1, b1, w2, b2, *, block_b=1024):
    """Fused MLP decoder.

    z  : (B, z_dim)          float32
    w1 : (z_dim, n_hidden)   float32   (PyTorch dec1.weight.T, optionally pre-padded)
    b1 : (1, n_hidden)       float32
    w2 : (n_hidden, out_ch)  float32   (PyTorch dec2.weight.T, optionally pre-padded)
    b2 : (1, out_ch)         float32
    returns (B, out_ch)      float32
    """
    B, z_dim = z.shape
    n_hidden = w1.shape[1]
    out_ch = w2.shape[1]
    b1 = b1.reshape(1, n_hidden)
    b2 = b2.reshape(1, out_ch)

    TB = _compute_tb(B, block_b)
    B_p = _round_up(B, TB)
    grid = (B_p // TB,)

    # Batch padding only when actually needed (fuses under jit).
    z_in = z if B_p == B else jnp.pad(z, ((0, B_p - B), (0, 0)))

    # Advisory cost for XLA scheduling around the custom call.
    cost = pl.CostEstimate(
        flops=2 * B_p * (z_dim * n_hidden + n_hidden * out_ch),
        transcendentals=B_p * out_ch,
        bytes_accessed=4 * (B_p * z_dim + z_dim * n_hidden + n_hidden
                            + n_hidden * out_ch + out_ch + B_p * out_ch),
    )

    # VMEM budget: double-buffered z/out tiles, double-buffered resident
    # weights/biases, hidden intermediate; capped well under v7x's 64 MiB.
    vmem_bytes = 4 * (2 * TB * (z_dim + out_ch)
                      + 2 * (z_dim * n_hidden + n_hidden
                             + n_hidden * out_ch + out_ch)
                      + 2 * TB * n_hidden)
    vmem_limit = int(min(max(2 * vmem_bytes, 16 << 20), 48 << 20))

    out_p = pl.pallas_call(
        _decoder_kernel,
        out_shape=jax.ShapeDtypeStruct((B_p, out_ch), jnp.float32),
        grid_spec=pltpu.PrefetchScalarGridSpec(
            num_scalar_prefetch=0,
            grid=grid,
            in_specs=[
                pl.BlockSpec((TB, z_dim), lambda i: (i, 0)),        # z tile / step
                pl.BlockSpec((z_dim, n_hidden), lambda i: (0, 0)),  # W1 resident
                pl.BlockSpec((1, n_hidden), lambda i: (0, 0)),      # b1 resident
                pl.BlockSpec((n_hidden, out_ch), lambda i: (0, 0)), # W2 resident
                pl.BlockSpec((1, out_ch), lambda i: (0, 0)),        # b2 resident
            ],
            out_specs=pl.BlockSpec((TB, out_ch), lambda i: (i, 0)),
        ),
        compiler_params=pltpu.CompilerParams(
            dimension_semantics=("parallel",),   # megacore-shardable batch axis
            vmem_limit_bytes=vmem_limit,
        ),
        cost_estimate=cost,
    )(z_in, w1, b1, w2, b2)

    # Only batch padding (if any) needs slicing away; feature dims are exact.
    return out_p if B_p == B else out_p[:B]


def init_decoder_params(key, out_ch, n_hidden, z_dim):
    """Deterministic synthetic parameters (PyTorch-Linear-like uniform init)."""
    k1, k2, k3, k4 = jax.random.split(key, 4)
    bound1 = 1.0 / jnp.sqrt(z_dim)
    bound2 = 1.0 / jnp.sqrt(n_hidden)
    w1 = jax.random.uniform(k1, (z_dim, n_hidden), jnp.float32, -bound1, bound1)
    b1 = jax.random.uniform(k2, (1, n_hidden), jnp.float32, -bound1, bound1)
    w2 = jax.random.uniform(k3, (n_hidden, out_ch), jnp.float32, -bound2, bound2)
    b2 = jax.random.uniform(k4, (1, out_ch), jnp.float32, -bound2, bound2)
    return w1, b1, w2, b2


def _reference(z, w1, b1, w2, b2):
    return jax.nn.sigmoid(jnp.maximum(z @ w1 + b1, 0.0) @ w2 + b2)


if __name__ == "__main__":
    key = jax.random.PRNGKey(0)
    k_params, k_z, k_z2 = jax.random.split(key, 3)

    # Small demo shapes consistent with the module.
    batch, z_dim, n_hidden, out_ch = 8, 16, 32, 64
    w1, b1, w2, b2 = init_decoder_params(k_params, out_ch, n_hidden, z_dim)

    # One-time parameter prep (hidden-dim lane padding) -- hoisted out of the
    # forward path.
    pw1, pb1, pw2, pb2 = prepare_decoder_params(w1, b1, w2, b2)

    # Case 1: tiny batch (no batch padding, single grid step).
    z = jax.random.normal(k_z, (batch, z_dim), jnp.float32)
    out = jax.block_until_ready(decoder_forward(z, pw1, pb1, pw2, pb2))
    ref = _reference(z, w1, b1, w2, b2)
    assert out.shape == (batch, out_ch)
    assert jnp.allclose(out, ref, atol=1e-5, rtol=1e-5)

    # Case 2: non-multiple batch with a small tile to exercise the batch
    # pipeline (multiple grid steps + batch padding/slicing path).
    z2 = jax.random.normal(k_z2, (300, z_dim), jnp.float32)
    out2 = jax.block_until_ready(
        decoder_forward(z2, pw1, pb1, pw2, pb2, block_b=128))
    ref2 = _reference(z2, w1, b1, w2, b2)
    assert out2.shape == (300, out_ch)
    assert jnp.allclose(out2, ref2, atol=1e-5, rtol=1e-5)

    print("KERNEL_OK")
</pallas_src>

<mosaic_0001>
module attributes {stable_mosaic.version = 11 : i64} {
  func.func @_decoder_kernel(%arg0: i32, %arg1: memref<8x16xf32, #tpu.memory_space<vmem>>, %arg2: memref<16x128xf32, #tpu.memory_space<vmem>>, %arg3: memref<1x128xf32, #tpu.memory_space<vmem>>, %arg4: memref<128x64xf32, #tpu.memory_space<vmem>>, %arg5: memref<1x64xf32, #tpu.memory_space<vmem>>, %arg6: memref<8x64xf32, #tpu.memory_space<vmem>>) attributes {dimension_semantics = [#tpu.dimension_semantics<parallel>], iteration_bounds = array<i64: 1>, scalar_prefetch = 0 : i64, scratch_operands = 0 : i64, tpu.core_type = #tpu.core_type<tc>, window_params = [{transform_indices = @transform_0, window_bounds = array<i64: 8, 16>}, {pipeline_mode = #tpu.pipeline_mode<synchronous>, transform_indices = @transform_1, window_bounds = array<i64: 16, 128>}, {pipeline_mode = #tpu.pipeline_mode<synchronous>, transform_indices = @transform_2, window_bounds = array<i64: 1, 128>}, {pipeline_mode = #tpu.pipeline_mode<synchronous>, transform_indices = @transform_3, window_bounds = array<i64: 128, 64>}, {pipeline_mode = #tpu.pipeline_mode<synchronous>, transform_indices = @transform_4, window_bounds = array<i64: 1, 64>}, {transform_indices = @transform_5, window_bounds = array<i64: 8, 64>}]} {
    %c0 = arith.constant 0 : index
    %c0_0 = arith.constant 0 : index
    %0 = vector.load %arg1[%c0, %c0_0] : memref<8x16xf32, #tpu.memory_space<vmem>>, vector<8x16xf32>
    %c0_1 = arith.constant 0 : index
    %c0_2 = arith.constant 0 : index
    %1 = vector.load %arg2[%c0_1, %c0_2] : memref<16x128xf32, #tpu.memory_space<vmem>>, vector<16x128xf32>
    %cst = arith.constant dense<0.000000e+00> : vector<8x128xf32>
    %2 = tpu.matmul %0, %1, %cst {dimension_numbers = #tpu.dot_dimension_numbers<[1], [0], [0], [1], [0, 0, 1, 1], [], []>} : vector<8x16xf32>, vector<16x128xf32>, vector<8x128xf32> -> vector<8x128xf32>
    %c0_3 = arith.constant 0 : index
    %c0_4 = arith.constant 0 : index
    %3 = vector.load %arg3[%c0_3, %c0_4] : memref<1x128xf32, #tpu.memory_space<vmem>>, vector<1x128xf32>
    %4 = vector.broadcast %3 : vector<1x128xf32> to vector<8x128xf32>
    %5 = arith.addf %2, %4 : vector<8x128xf32>
    %cst_5 = arith.constant 0.000000e+00 : f32
    %6 = vector.broadcast %cst_5 : f32 to vector<8x128xf32>
    %7 = arith.maximumf %5, %6 : vector<8x128xf32>
    %c0_6 = arith.constant 0 : index
    %c0_7 = arith.constant 0 : index
    %8 = vector.load %arg4[%c0_6, %c0_7] : memref<128x64xf32, #tpu.memory_space<vmem>>, vector<128x64xf32>
    %cst_8 = arith.constant dense<0.000000e+00> : vector<8x64xf32>
    %9 = tpu.matmul %7, %8, %cst_8 {dimension_numbers = #tpu.dot_dimension_numbers<[1], [0], [0], [1], [0, 0, 1, 1], [], []>} : vector<8x128xf32>, vector<128x64xf32>, vector<8x64xf32> -> vector<8x64xf32>
    %c0_9 = arith.constant 0 : index
    %c0_10 = arith.constant 0 : index
    %10 = vector.load %arg5[%c0_9, %c0_10] : memref<1x64xf32, #tpu.memory_space<vmem>>, vector<1x64xf32>
    %11 = vector.broadcast %10 : vector<1x64xf32> to vector<8x64xf32>
    %12 = arith.addf %9, %11 : vector<8x64xf32>
    %cst_11 = arith.constant 5.000000e-01 : f32
    %13 = vector.broadcast %cst_11 : f32 to vector<8x64xf32>
    %14 = arith.mulf %13, %12 : vector<8x64xf32>
    %15 = math.tanh %14 : vector<8x64xf32>
    %cst_12 = arith.constant 5.000000e-01 : f32
    %16 = vector.broadcast %cst_12 : f32 to vector<8x64xf32>
    %17 = arith.mulf %16, %15 : vector<8x64xf32>
    %cst_13 = arith.constant 5.000000e-01 : f32
    %18 = vector.broadcast %cst_13 : f32 to vector<8x64xf32>
    %19 = arith.addf %17, %18 : vector<8x64xf32>
    %c0_14 = arith.constant 0 : index
    %c0_15 = arith.constant 0 : index
    %20 = vector.load %arg6[%c0_14, %c0_15] : memref<8x64xf32, #tpu.memory_space<vmem>>, vector<8x64xf32>
    tpu.vector_store %arg6[%c0_14, %c0_15], %19 {strides = array<i32>} : memref<8x64xf32, #tpu.memory_space<vmem>>, vector<8x64xf32>,
    return
  }
  func.func @transform_0(%arg0: i32) -> (i32, i32) {
    %c0_i32 = arith.constant 0 : i32
    %c0_i32_0 = arith.constant 0 : i32
    return %arg0, %c0_i32 : i32, i32
  }
  func.func @transform_1(%arg0: i32) -> (i32, i32) {
    %c0_i32 = arith.constant 0 : i32
    %c0_i32_0 = arith.constant 0 : i32
    %c0_i32_1 = arith.constant 0 : i32
    return %c0_i32, %c0_i32_0 : i32, i32
  }
  func.func @transform_2(%arg0: i32) -> (i32, i32) {
    %c0_i32 = arith.constant 0 : i32
    %c0_i32_0 = arith.constant 0 : i32
    %c0_i32_1 = arith.constant 0 : i32
    return %c0_i32, %c0_i32_0 : i32, i32
  }
  func.func @transform_3(%arg0: i32) -> (i32, i32) {
    %c0_i32 = arith.constant 0 : i32
    %c0_i32_0 = arith.constant 0 : i32
    %c0_i32_1 = arith.constant 0 : i32
    return %c0_i32, %c0_i32_0 : i32, i32
  }
  func.func @transform_4(%arg0: i32) -> (i32, i32) {
    %c0_i32 = arith.constant 0 : i32
    %c0_i32_0 = arith.constant 0 : i32
    %c0_i32_1 = arith.constant 0 : i32
    return %c0_i32, %c0_i32_0 : i32, i32
  }
  func.func @transform_5(%arg0: i32) -> (i32, i32) {
    %c0_i32 = arith.constant 0 : i32
    %c0_i32_0 = arith.constant 0 : i32
    return %arg0, %c0_i32 : i32, i32
  }
}

</mosaic_0001>

<llo_original>
// kernel: decoder_forward.1
$region0: #{decoder_forward.1}
  #allocation0 [shape = 'u32[]', space=smem, size = 0x4, offset = 0x4, fixed_abs, tag = 'smem constant byte address 0x4 - core index']
  #allocation1 [shape = 'u32[144,128]{1,0:T(1,128)}', space=vmem, size = 0x12000, scoped, tag = 'internal scratch']
  %s0 = inlined_call_operand.vmem [shape: f32[8,16], index: 0, kind: input, shape index: {}]
  %s1 = inlined_call_operand.vmem [shape: f32[16,128], index: 1, kind: input, shape index: {}]
  %s2 = inlined_call_operand.vmem [shape: f32[1,128], index: 2, kind: input, shape index: {}]
  %s3 = inlined_call_operand.vmem [shape: f32[128,64], index: 3, kind: input, shape index: {}]
  %s4 = inlined_call_operand.vmem [shape: f32[1,64], index: 4, kind: input, shape index: {}]
  %s5 = inlined_call_operand.hbm [shape: f32[8,64], index: 5, kind: output, shape index: {}]
  %s6 = sld [smem:[#allocation0]]
  $region30: #{decoder_forward.1} parent=0
    _
  %s8 = ssub.s32 1, %s6
  %s9 = scalar_select 0, %s8, %s6
  $region1: #{decoder_forward.1} parent=0
    #allocation2 [shape = 'u8[4096]{0}', space=vmem, size = 0x1000, scoped, tag = 'output window, operand 0, single buffered']
    #allocation3 [shape = 's32[1]{0}', space=sflag, size = 0x4, scoped, tag = 'scoped memory for decoder_forward.1']
    %10 = vsyncpa [#allocation3], 0
    // Predicated region
    $region2: #{decoder_forward.1} parent=1 // pred_check
      _
    $region3: #{decoder_forward.1} parent=1 // pred_check_branch
      %12 = sbr.rel (0) target = $region5
    $region4: #{decoder_forward.1} parent=1 // pred_region
      _
    $region5: #{decoder_forward.1} parent=1 // pred_fallthru
      _
    // Predicated region
    $region6: #{decoder_forward.1} parent=1 // pred_check
      _
    $region7: #{decoder_forward.1} parent=1 // pred_check_branch
      %14 = sbr.rel (0) target = $region9
    $region8: #{decoder_forward.1} parent=1 // pred_region
      _
    $region9: #{decoder_forward.1} parent=1 // pred_fallthru
      _
    // Predicated region
    $region10: #{decoder_forward.1} parent=1 // pred_check
      _
    $region11: #{decoder_forward.1} parent=1 // pred_check_branch
      %16 = sbr.rel (0) target = $region13
    $region12: #{decoder_forward.1} parent=1 // pred_region
      _
    $region13: #{decoder_forward.1} parent=1 // pred_fallthru
      _
    // Predicated region
    $region14: #{decoder_forward.1} parent=1 // pred_check
      _
    $region15: #{decoder_forward.1} parent=1 // pred_check_branch
      %18 = sbr.rel (0) target = $region17
    $region16: #{decoder_forward.1} parent=1 // pred_region
      _
    $region17: #{decoder_forward.1} parent=1 // pred_fallthru
      _
    // Predicated region
    $region18: #{decoder_forward.1} parent=1 // pred_check
      _
    $region19: #{decoder_forward.1} parent=1 // pred_check_branch
      %20 = sbr.rel (0) target = $region21
    $region20: #{decoder_forward.1} parent=1 // pred_region
      _
    $region21: #{decoder_forward.1} parent=1 // pred_fallthru
      _
    %v21 = vld [vmem:[%s0] sm:$0xff]
    %v22 = vld [vmem:[%s1] sm:$0xff]
    %v23 = vld [vmem:[%s1 + $0x8] sm:$0xff]
    %v24 = vld [vmem:[%s2] sm:$0x1]
    %v26 = vlaneseq
    %v27 = vshrl.u32 %v26, 7
    %v28 = vsub.s32 0, %v27
    %v29 = vrot.slane %v24, %v28
    %vm31 = vcmask 130048
    %v33 = vsel %vm31, %v21, 0
    %35 = vmatprep.subr.mxu0 0.0
    %36 = vmatpush1.msra.mxu0 %v22
    %37 = vmatprep.subr.mxu0 0.0
    %38 = vmatpush1.msra.mxu0 %v23
    %39 = vmatprep.subr.mxu0 0.0
    %40 = vmatpush1.msra.mxu0 0.0
    %41 = vmatprep.subr.mxu0 0.0
    %42 = vmatpush1.msra.mxu0 0.0
    %43 = vmatprep.subr.mxu0 0.0
    %44 = vmatpush1.msra.mxu0 0.0
    %45 = vmatprep.subr.mxu0 0.0
    %46 = vmatpush1.msra.mxu0 0.0
    %47 = vmatprep.subr.mxu0 0.0
    %48 = vmatpush1.msra.mxu0 0.0
    %49 = vmatprep.subr.mxu0 0.0
    %50 = vmatpush1.msra.mxu0 0.0
    %51 = vmatprep.subr.mxu0 0.0
    %52 = vmatpush1.msra.mxu0 0.0
    %53 = vmatprep.subr.mxu0 0.0
    %54 = vmatpush1.msra.mxu0 0.0
    %55 = vmatprep.subr.mxu0 0.0
    %56 = vmatpush1.msra.mxu0 0.0
    %57 = vmatprep.subr.mxu0 0.0
    %58 = vmatpush1.msra.mxu0 0.0
    %59 = vmatprep.subr.mxu0 0.0
    %60 = vmatpush1.msra.mxu0 0.0
    %61 = vmatprep.subr.mxu0 0.0
    %62 = vmatpush1.msra.mxu0 0.0
    %63 = vmatprep.subr.mxu0 0.0
    %64 = vmatpush1.msra.mxu0 0.0
    %65 = vmatprep.subr.mxu0 0.0
    %66 = vmatpush1.msra.mxu0 0.0
    %67 = vmatprep.subr.mxu0 0.0
    %68 = vmatpush1.msra.mxu0 0.0
    %69 = vmatprep.subr.mxu0 0.0
    %70 = vmatpush1.msra.mxu0 0.0
    %71 = vmatprep.subr.mxu0 0.0
    %72 = vmatpush1.msra.mxu0 0.0
    %73 = vmatprep.subr.mxu0 0.0
    %74 = vmatpush1.msra.mxu0 0.0
    %75 = vmatprep.subr.mxu0 0.0
    %76 = vmatpush1.msra.mxu0 0.0
    %77 = vmatprep.subr.mxu0 0.0
    %78 = vmatpush1.msra.mxu0 0.0
    %79 = vmatprep.subr.mxu0 0.0
    %80 = vmatpush1.msra.mxu0 0.0
    %81 = vmatprep.subr.mxu0 0.0
    %82 = vmatpush1.msra.mxu0 0.0
    %83 = vmatprep.subr.mxu0 0.0
    %84 = vmatpush1.msra.mxu0 0.0
    %85 = vmatprep.subr.mxu0 0.0
    %86 = vmatpush1.msra.mxu0 0.0
    %87 = vmatprep.subr.mxu0 0.0
    %88 = vmatpush1.msra.mxu0 0.0
    %89 = vmatprep.subr.mxu0 0.0
    %90 = vmatpush1.msra.mxu0 0.0
    %91 = vmatprep.subr.mxu0 0.0
    %92 = vmatpush1.msra.mxu0 0.0
    %93 = vmatprep.subr.mxu0 0.0
    %94 = vmatpush1.msra.mxu0 0.0
    %95 = vmatprep.subr.mxu0 0.0
    %96 = vmatpush1.msra.mxu0 0.0
    %97 = vmatprep.subr.mxu0 0.0
    %98 = vmatpush1.msra.mxu0 0.0
    %99 = vmatprep.mubr.f32.mxu0 0.0
    %100 = vmatmul.mubr.f32.gmra.mrb[0].mxu0 %v33
    %v101 = vpop.f32.mrb[0].mxu0
    %v102 = vadd.f32 %v29, %v101
    %v103 = vpop.f32.mrb[0].mxu0
    %104 = vdwg.mxu0
    %v105 = vmax.f32 %v102, 0.0
    %v106 = vld [vmem:[%s3] sm:$0xff]
    %v107 = vld [vmem:[%s3 + $0x8] sm:$0xff]
    %v108 = vld [vmem:[%s3 + $0x10] sm:$0xff]
    %v109 = vld [vmem:[%s3 + $0x18] sm:$0xff]
    %v110 = vld [vmem:[%s3 + $0x20] sm:$0xff]
    %v111 = vld [vmem:[%s3 + $0x28] sm:$0xff]
    %v112 = vld [vmem:[%s3 + $0x30] sm:$0xff]
    %v113 = vld [vmem:[%s3 + $0x38] sm:$0xff]
    %v114 = vld [vmem:[%s3 + $0x40] sm:$0xff]
    %v115 = vld [vmem:[%s3 + $0x48] sm:$0xff]
    %v116 = vld [vmem:[%s3 + $0x50] sm:$0xff]
    %v117 = vld [vmem:[%s3 + $0x58] sm:$0xff]
    %v118 = vld [vmem:[%s3 + $0x60] sm:$0xff]
    %v119 = vld [vmem:[%s3 + $0x68] sm:$0xff]
    %v120 = vld [vmem:[%s3 + $0x70] sm:$0xff]
    %v121 = vld [vmem:[%s3 + $0x78] sm:$0xff]
    %v122 = vld [vmem:[%s4] sm:$0x1]
    %v124 = vlaneseq
    %v125 = vshrl.u32 %v124, 7
    %v126 = vsub.s32 0, %v125
    %v127 = vrot.slane %v122, %v126
    %129 = vmatprep.subr.mxu0 0.0
    %130 = vmatpush1.msra.mxu0 %v106
    %131 = vmatprep.subr.mxu0 0.0
    %132 = vmatpush1.msra.mxu0 %v107
    %133 = vmatprep.subr.mxu0 0.0
    %134 = vmatpush1.msra.mxu0 %v108
    %135 = vmatprep.subr.mxu0 0.0
    %136 = vmatpush1.msra.mxu0 %v109
    %137 = vmatprep.subr.mxu0 0.0
    %138 = vmatpush1.msra.mxu0 %v110
    %139 = vmatprep.subr.mxu0 0.0
    %140 = vmatpush1.msra.mxu0 %v111
    %141 = vmatprep.subr.mxu0 0.0
    %142 = vmatpush1.msra.mxu0 %v112
    %143 = vmatprep.subr.mxu0 0.0
    %144 = vmatpush1.msra.mxu0 %v113
    %145 = vmatprep.subr.mxu0 0.0
    %146 = vmatpush1.msra.mxu0 %v114
    %147 = vmatprep.subr.mxu0 0.0
    %148 = vmatpush1.msra.mxu0 %v115
    %149 = vmatprep.subr.mxu0 0.0
    %150 = vmatpush1.msra.mxu0 %v116
    %151 = vmatprep.subr.mxu0 0.0
    %152 = vmatpush1.msra.mxu0 %v117
    %153 = vmatprep.subr.mxu0 0.0
    %154 = vmatpush1.msra.mxu0 %v118
    %155 = vmatprep.subr.mxu0 0.0
    %156 = vmatpush1.msra.mxu0 %v119
    %157 = vmatprep.subr.mxu0 0.0
    %158 = vmatpush1.msra.mxu0 %v120
    %159 = vmatprep.subr.mxu0 0.0
    %160 = vmatpush1.msra.mxu0 %v121
    %161 = vmatprep.subr.mxu0 0.0
    %162 = vmatpush1.msra.mxu0 0.0
    %163 = vmatprep.subr.mxu0 0.0
    %164 = vmatpush1.msra.mxu0 0.0
    %165 = vmatprep.subr.mxu0 0.0
    %166 = vmatpush1.msra.mxu0 0.0
    %167 = vmatprep.subr.mxu0 0.0
    %168 = vmatpush1.msra.mxu0 0.0
    %169 = vmatprep.subr.mxu0 0.0
    %170 = vmatpush1.msra.mxu0 0.0
    %171 = vmatprep.subr.mxu0 0.0
    %172 = vmatpush1.msra.mxu0 0.0
    %173 = vmatprep.subr.mxu0 0.0
    %174 = vmatpush1.msra.mxu0 0.0
    %175 = vmatprep.subr.mxu0 0.0
    %176 = vmatpush1.msra.mxu0 0.0
    %177 = vmatprep.subr.mxu0 0.0
    %178 = vmatpush1.msra.mxu0 0.0
    %179 = vmatprep.subr.mxu0 0.0
    %180 = vmatpush1.msra.mxu0 0.0
    %181 = vmatprep.subr.mxu0 0.0
    %182 = vmatpush1.msra.mxu0 0.0
    %183 = vmatprep.subr.mxu0 0.0
    %184 = vmatpush1.msra.mxu0 0.0
    %185 = vmatprep.subr.mxu0 0.0
    %186 = vmatpush1.msra.mxu0 0.0
    %187 = vmatprep.subr.mxu0 0.0
    %188 = vmatpush1.msra.mxu0 0.0
    %189 = vmatprep.subr.mxu0 0.0
    %190 = vmatpush1.msra.mxu0 0.0
    %191 = vmatprep.subr.mxu0 0.0
    %192 = vmatpush1.msra.mxu0 0.0
    %193 = vmatprep.mubr.f32.mxu0 0.0
    %194 = vmatmul.mubr.f32.gmra.mrb[0].mxu0 %v105
    %v195 = vpop.f32.mrb[0].mxu0
    %v196 = vadd.f32 %v127, %v195
    %v197 = vpop.f32.mrb[0].mxu0
    %198 = vdwg.mxu0
    %v199 = vmul.f32 %v196, 0.5
    %v200 = vtanh.pop %v199
    %v201 = vmul.f32 %v200, 0.5
    %v202 = vadd.f32 %v201, 0.5
    %vm203 = vcmask 523264
    %204 = vst.msk [vmem:[#allocation2] sm:$0xff] %vm203, %v202
    // Predicated region
    $region22: #{decoder_forward.1} parent=1 // pred_check
      _
    $region23: #{decoder_forward.1} parent=1 // pred_check_branch
      %206 = sbr.rel (0) target = $region25
    $region24: #{decoder_forward.1} parent=1 // pred_region
      %s208 = ssub.s32 128, 128
      %209 = vsyncadd [#allocation3], %s208
      %s211 = sshll.u32 [#allocation2], 4
      %s212 = int_to_ptr.vmem [resolvable:$true] %s211
      %214 = dma.vmem_to_hbm [thread:$0]  %s212, 128, %s5, [#allocation3]
    $region25: #{decoder_forward.1} parent=1 // pred_fallthru
      _
    // Predicated region
    $region26: #{decoder_forward.1} parent=1 // pred_check
      _
    $region27: #{decoder_forward.1} parent=1 // pred_check_branch
      %216 = sbr.rel (0) target = $region29
    $region28: #{decoder_forward.1} parent=1 // pred_region
      %217 = dma.done [#allocation3], 128
    $region29: #{decoder_forward.1} parent=1 // pred_fallthru
      _
    %218 = vsyncpa [#allocation3], 1

</llo_original>
